<compile_context>
chip_gen: v5e
topology: v5e:2x2
jax: 0.10.0
libtpu: 0.0.40
codegen_flags: <defaults>
</compile_context>

<pallas_src>
import jax
import jax.numpy as jnp
from jax.experimental import pallas as pl
from jax.experimental.pallas import tpu as pltpu


def _round_up(x, m):
    return ((x + m - 1) // m) * m


def _two_mlp_head_kernel(x_ref, w6_ref, b6_ref, w7_ref, b7_ref, out_ref, acc_ref):
    """One (row-tile i, reduction-tile k) grid step."""
    k = pl.program_id(1)

    # Init the fc6 accumulator on the first K step of this row tile.
    @pl.when(k == 0)
    def _():
        acc_ref[...] = jnp.zeros_like(acc_ref)

    # Partial fc6 matmul on the MXU, accumulated in f32.
    acc_ref[...] += jnp.dot(
        x_ref[...], w6_ref[...], preferred_element_type=jnp.float32
    )

    # Epilogue only on the last K step: bias+ReLU, then fc7+bias+ReLU.
    @pl.when(k == pl.num_programs(1) - 1)
    def _():
        h = jnp.maximum(acc_ref[...] + b6_ref[...], 0.0)     # f32
        h = h.astype(w7_ref.dtype)                           # deliberate bf16 cast
        o = jnp.dot(h, w7_ref[...], preferred_element_type=jnp.float32)
        o = jnp.maximum(o + b7_ref[...], 0.0)
        out_ref[...] = o.astype(out_ref.dtype)


def two_mlp_head(x_nchw, w6, b6, w7, b7, *, tm=256, tk=512,
                 compute_dtype=jnp.bfloat16):
    """TwoMLPHead forward.

    x_nchw: (N, C, H, W) f32
    w6:     (C*H*W, rep)  (transposed vs torch nn.Linear.weight)
    b6:     (rep,)
    w7:     (rep, rep)
    b7:     (rep,)
    Returns (N, rep) f32.
    """
    n = x_nchw.shape[0]
    d_in = x_nchw.shape[1] * x_nchw.shape[2] * x_nchw.shape[3]
    rep = w6.shape[1]

    # Flatten exactly like torch.flatten(start_dim=1) on contiguous NCHW.
    x_flat = x_nchw.reshape(n, d_in)

    # ---- tile plan --------------------------------------------------------
    tm = min(tm, _round_up(n, 8))        # row tile (sublane multiple of 8)
    tk = min(tk, _round_up(d_in, 128))   # fc6 reduction tile (lane multiple of 128)
    n_pad = _round_up(n, tm)
    k_pad = _round_up(d_in, tk)
    grid = (n_pad // tm, k_pad // tk)

    # ---- pad + cast (zero padding contributes nothing to the dots) --------
    x_p = jnp.zeros((n_pad, k_pad), compute_dtype).at[:n, :d_in].set(
        x_flat.astype(compute_dtype))
    w6_p = jnp.zeros((k_pad, rep), compute_dtype).at[:d_in, :].set(
        w6.astype(compute_dtype))
    w7_c = w7.astype(compute_dtype)
    b6_2d = b6.reshape(1, rep).astype(jnp.float32)
    b7_2d = b7.reshape(1, rep).astype(jnp.float32)

    # ---- VMEM budget from the tile plan (double-buffered inputs + acc + out),
    # clamped below v7x's 64 MiB-per-TC physical VMEM with headroom.
    itemsize = jnp.dtype(compute_dtype).itemsize
    vmem_bytes = (
        2 * (tm * tk + tk * rep + rep * rep + 2 * rep) * itemsize  # dbl-buf inputs
        + tm * rep * 4                                             # accumulator
        + 2 * tm * rep * 4                                         # dbl-buf output
        + (8 << 20)                                                # headroom
    )
    vmem_bytes = int(max(16 << 20, min(vmem_bytes, 48 << 20)))

    cost = pl.CostEstimate(
        flops=2 * n_pad * k_pad * rep + 2 * n_pad * rep * rep,
        transcendentals=0,
        bytes_accessed=(x_p.size + w6_p.size + w7_c.size) * itemsize
        + (b6_2d.size + b7_2d.size) * 4 + n_pad * rep * 4,
    )

    out = pl.pallas_call(
        _two_mlp_head_kernel,
        out_shape=jax.ShapeDtypeStruct((n_pad, rep), jnp.float32),
        grid_spec=pltpu.PrefetchScalarGridSpec(
            num_scalar_prefetch=0,
            grid=grid,
            in_specs=[
                pl.BlockSpec((tm, tk), lambda i, k: (i, k)),    # x tile
                pl.BlockSpec((tk, rep), lambda i, k: (k, 0)),   # w6 K-slab
                pl.BlockSpec((1, rep), lambda i, k: (0, 0)),    # b6 (resident)
                pl.BlockSpec((rep, rep), lambda i, k: (0, 0)),  # w7 (resident)
                pl.BlockSpec((1, rep), lambda i, k: (0, 0)),    # b7 (resident)
            ],
            out_specs=pl.BlockSpec((tm, rep), lambda i, k: (i, 0)),
            scratch_shapes=[pltpu.VMEM((tm, rep), jnp.float32)],
        ),
        compiler_params=pltpu.CompilerParams(
            dimension_semantics=("parallel", "arbitrary"),
            vmem_limit_bytes=vmem_bytes,
        ),
        cost_estimate=cost,
    )(x_p, w6_p, b6_2d, w7_c, b7_2d)

    return out[:n]


if __name__ == "__main__":
    # Small shapes consistent with the module: N=2, C=4, H=W=16.
    N, C, H, W = 2, 4, 16, 16
    in_channels = C * H * W              # 1024  -> 2 K-tiles of 512
    representation_size = 128

    key = jax.random.PRNGKey(0)
    kx, k6w, k6b, k7w, k7b = jax.random.split(key, 5)

    x = jax.random.normal(kx, (N, C, H, W), dtype=jnp.float32)

    # Deterministic init mimicking nn.Linear's U(-1/sqrt(fan_in), 1/sqrt(fan_in)).
    bound6 = 1.0 / jnp.sqrt(jnp.float32(in_channels))
    bound7 = 1.0 / jnp.sqrt(jnp.float32(representation_size))
    w6 = jax.random.uniform(k6w, (in_channels, representation_size),
                            jnp.float32, -bound6, bound6)
    b6 = jax.random.uniform(k6b, (representation_size,), jnp.float32,
                            -bound6, bound6)
    w7 = jax.random.uniform(k7w, (representation_size, representation_size),
                            jnp.float32, -bound7, bound7)
    b7 = jax.random.uniform(k7b, (representation_size,), jnp.float32,
                            -bound7, bound7)

    out = two_mlp_head(x, w6, b6, w7, b7)
    jax.block_until_ready(out)

    # Reference 1: same bf16 casts, f32 accumulation (tight tolerance).
    x_flat = x.reshape(N, -1)
    xb, w6b, w7b = (a.astype(jnp.bfloat16) for a in (x_flat, w6, w7))
    h = jnp.maximum(jnp.dot(xb, w6b, preferred_element_type=jnp.float32) + b6, 0.0)
    ref_bf16 = jnp.maximum(
        jnp.dot(h.astype(jnp.bfloat16), w7b, preferred_element_type=jnp.float32) + b7,
        0.0)

    # Reference 2: pure f32 semantics of the torch module (loose tolerance, bf16 inputs).
    ref_f32 = jnp.maximum(x_flat @ w6 + b6, 0.0)
    ref_f32 = jnp.maximum(ref_f32 @ w7 + b7, 0.0)

    assert out.shape == (N, representation_size)
    assert jnp.allclose(out, ref_bf16, atol=1e-3, rtol=1e-3)
    assert jnp.allclose(out, ref_f32, atol=3e-2, rtol=3e-2)

    print("KERNEL_OK")
</pallas_src>

<mosaic_0001>
module attributes {stable_mosaic.version = 11 : i64} {
  func.func @_two_mlp_head_kernel(%arg0: i32, %arg1: i32, %arg2: memref<8x512xbf16, #tpu.memory_space<vmem>>, %arg3: memref<512x128xbf16, #tpu.memory_space<vmem>>, %arg4: memref<1x128xf32, #tpu.memory_space<vmem>>, %arg5: memref<128x128xbf16, #tpu.memory_space<vmem>>, %arg6: memref<1x128xf32, #tpu.memory_space<vmem>>, %arg7: memref<8x128xf32, #tpu.memory_space<vmem>>, %arg8: memref<8x128xf32, #tpu.memory_space<vmem>>) attributes {dimension_semantics = [#tpu.dimension_semantics<parallel>, #tpu.dimension_semantics<arbitrary>], iteration_bounds = array<i64: 1, 2>, scalar_prefetch = 0 : i64, scratch_operands = 1 : i64, tpu.core_type = #tpu.core_type<tc>, window_params = [{transform_indices = @transform_0, window_bounds = array<i64: 8, 512>}, {transform_indices = @transform_1, window_bounds = array<i64: 512, 128>}, {pipeline_mode = #tpu.pipeline_mode<synchronous>, transform_indices = @transform_2, window_bounds = array<i64: 1, 128>}, {pipeline_mode = #tpu.pipeline_mode<synchronous>, transform_indices = @transform_3, window_bounds = array<i64: 128, 128>}, {pipeline_mode = #tpu.pipeline_mode<synchronous>, transform_indices = @transform_4, window_bounds = array<i64: 1, 128>}, {transform_indices = @transform_5, window_bounds = array<i64: 8, 128>}]} {
    %c0_i32 = arith.constant 0 : i32
    %0 = arith.cmpi eq, %arg1, %c0_i32 : i32
    %1 = arith.extui %0 : i1 to i32
    %c0_i32_0 = arith.constant 0 : i32
    %2 = arith.cmpi ne, %1, %c0_i32_0 : i32
    scf.if %2 {
      %cst_9 = arith.constant 0.000000e+00 : f32
      %12 = vector.broadcast %cst_9 : f32 to vector<8x128xf32>
      %c0_10 = arith.constant 0 : index
      %c0_11 = arith.constant 0 : index
      %13 = vector.load %arg8[%c0_10, %c0_11] : memref<8x128xf32, #tpu.memory_space<vmem>>, vector<8x128xf32>
      tpu.vector_store %arg8[%c0_10, %c0_11], %12 {strides = array<i32>} : memref<8x128xf32, #tpu.memory_space<vmem>>, vector<8x128xf32>,
    } else {
    }
    %c0 = arith.constant 0 : index
    %c0_1 = arith.constant 0 : index
    %3 = vector.load %arg8[%c0, %c0_1] : memref<8x128xf32, #tpu.memory_space<vmem>>, vector<8x128xf32>
    %c0_2 = arith.constant 0 : index
    %c0_3 = arith.constant 0 : index
    %4 = vector.load %arg2[%c0_2, %c0_3] : memref<8x512xbf16, #tpu.memory_space<vmem>>, vector<8x512xbf16>
    %c0_4 = arith.constant 0 : index
    %c0_5 = arith.constant 0 : index
    %5 = vector.load %arg3[%c0_4, %c0_5] : memref<512x128xbf16, #tpu.memory_space<vmem>>, vector<512x128xbf16>
    %cst = arith.constant dense<0.000000e+00> : vector<8x128xf32>
    %6 = tpu.matmul %4, %5, %cst {dimension_numbers = #tpu.dot_dimension_numbers<[1], [0], [0], [1], [0, 0, 1, 1], [], []>} : vector<8x512xbf16>, vector<512x128xbf16>, vector<8x128xf32> -> vector<8x128xf32>
    %7 = arith.addf %3, %6 : vector<8x128xf32>
    %c0_6 = arith.constant 0 : index
    %c0_7 = arith.constant 0 : index
    %8 = vector.load %arg8[%c0_6, %c0_7] : memref<8x128xf32, #tpu.memory_space<vmem>>, vector<8x128xf32>
    tpu.vector_store %arg8[%c0_6, %c0_7], %7 {strides = array<i32>} : memref<8x128xf32, #tpu.memory_space<vmem>>, vector<8x128xf32>,
    %c1_i32 = arith.constant 1 : i32
    %9 = arith.cmpi eq, %arg1, %c1_i32 : i32
    %10 = arith.extui %9 : i1 to i32
    %c0_i32_8 = arith.constant 0 : i32
    %11 = arith.cmpi ne, %10, %c0_i32_8 : i32
    scf.if %11 {
      %c0_9 = arith.constant 0 : index
      %c0_10 = arith.constant 0 : index
      %12 = vector.load %arg8[%c0_9, %c0_10] : memref<8x128xf32, #tpu.memory_space<vmem>>, vector<8x128xf32>
      %c0_11 = arith.constant 0 : index
      %c0_12 = arith.constant 0 : index
      %13 = vector.load %arg4[%c0_11, %c0_12] : memref<1x128xf32, #tpu.memory_space<vmem>>, vector<1x128xf32>
      %14 = vector.broadcast %13 : vector<1x128xf32> to vector<8x128xf32>
      %15 = arith.addf %12, %14 : vector<8x128xf32>
      %cst_13 = arith.constant 0.000000e+00 : f32
      %16 = vector.broadcast %cst_13 : f32 to vector<8x128xf32>
      %17 = arith.maximumf %15, %16 : vector<8x128xf32>
      %18 = arith.truncf %17 : vector<8x128xf32> to vector<8x128xbf16>
      %c0_14 = arith.constant 0 : index
      %c0_15 = arith.constant 0 : index
      %19 = vector.load %arg5[%c0_14, %c0_15] : memref<128x128xbf16, #tpu.memory_space<vmem>>, vector<128x128xbf16>
      %cst_16 = arith.constant dense<0.000000e+00> : vector<8x128xf32>
      %20 = tpu.matmul %18, %19, %cst_16 {dimension_numbers = #tpu.dot_dimension_numbers<[1], [0], [0], [1], [0, 0, 1, 1], [], []>} : vector<8x128xbf16>, vector<128x128xbf16>, vector<8x128xf32> -> vector<8x128xf32>
      %c0_17 = arith.constant 0 : index
      %c0_18 = arith.constant 0 : index
      %21 = vector.load %arg6[%c0_17, %c0_18] : memref<1x128xf32, #tpu.memory_space<vmem>>, vector<1x128xf32>
      %22 = vector.broadcast %21 : vector<1x128xf32> to vector<8x128xf32>
      %23 = arith.addf %20, %22 : vector<8x128xf32>
      %cst_19 = arith.constant 0.000000e+00 : f32
      %24 = vector.broadcast %cst_19 : f32 to vector<8x128xf32>
      %25 = arith.maximumf %23, %24 : vector<8x128xf32>
      %c0_20 = arith.constant 0 : index
      %c0_21 = arith.constant 0 : index
      %26 = vector.load %arg7[%c0_20, %c0_21] : memref<8x128xf32, #tpu.memory_space<vmem>>, vector<8x128xf32>
      tpu.vector_store %arg7[%c0_20, %c0_21], %25 {strides = array<i32>} : memref<8x128xf32, #tpu.memory_space<vmem>>, vector<8x128xf32>,
    } else {
    }
    return
  }
  func.func @transform_0(%arg0: i32, %arg1: i32) -> (i32, i32) {
    %c0_i32 = arith.constant 0 : i32
    return %arg0, %arg1 : i32, i32
  }
  func.func @transform_1(%arg0: i32, %arg1: i32) -> (i32, i32) {
    %c0_i32 = arith.constant 0 : i32
    %c0_i32_0 = arith.constant 0 : i32
    return %arg1, %c0_i32 : i32, i32
  }
  func.func @transform_2(%arg0: i32, %arg1: i32) -> (i32, i32) {
    %c0_i32 = arith.constant 0 : i32
    %c0_i32_0 = arith.constant 0 : i32
    %c0_i32_1 = arith.constant 0 : i32
    return %c0_i32, %c0_i32_0 : i32, i32
  }
  func.func @transform_3(%arg0: i32, %arg1: i32) -> (i32, i32) {
    %c0_i32 = arith.constant 0 : i32
    %c0_i32_0 = arith.constant 0 : i32
    %c0_i32_1 = arith.constant 0 : i32
    return %c0_i32, %c0_i32_0 : i32, i32
  }
  func.func @transform_4(%arg0: i32, %arg1: i32) -> (i32, i32) {
    %c0_i32 = arith.constant 0 : i32
    %c0_i32_0 = arith.constant 0 : i32
    %c0_i32_1 = arith.constant 0 : i32
    return %c0_i32, %c0_i32_0 : i32, i32
  }
  func.func @transform_5(%arg0: i32, %arg1: i32) -> (i32, i32) {
    %c0_i32 = arith.constant 0 : i32
    %c0_i32_0 = arith.constant 0 : i32
    return %arg0, %c0_i32 : i32, i32
  }
}

</mosaic_0001>

<llo_original>
// kernel: tpu_custom_call.1
$region0: #{tpu_custom_call.1}
  #allocation0 [shape = 'u32[]', space=smem, size = 0x4, offset = 0x4, fixed_abs, tag = 'smem constant byte address 0x4 - core index']
  #allocation1 [shape = 'u32[72,128]{1,0:T(1,128)}', space=vmem, size = 0x9000, scoped, tag = 'internal scratch']
  #allocation2 [shape = 'f32[8,128]{1,0:T(8,128)}', space=vmem, size = 0x1000, scoped, tag = 'scratch operand']
  %s0 = inlined_call_operand.hbm [shape: bf16[8,1024], index: 0, kind: input, shape index: {}]
  %s1 = inlined_call_operand.hbm [shape: bf16[1024,128], index: 1, kind: input, shape index: {}]
  %s2 = inlined_call_operand.vmem [shape: f32[1,128], index: 2, kind: input, shape index: {}]
  %s3 = inlined_call_operand.hbm [shape: bf16[128,128], index: 3, kind: input, shape index: {}]
  %s4 = inlined_call_operand.vmem [shape: f32[1,128], index: 4, kind: input, shape index: {}]
  %s5 = inlined_call_operand.hbm [shape: f32[8,128], index: 5, kind: output, shape index: {}]
  %s6 = sld [smem:[#allocation0]]
  $region73: #{tpu_custom_call.1} parent=0
    _
  %s8 = ssub.s32 1, %s6
  %s9 = scalar_select 0, %s8, %s6
  $region1: #{tpu_custom_call.1} parent=0
    #allocation3 [shape = 'u8[16384]{0}', space=vmem, size = 0x4000, scoped, tag = 'input window, operand 0']
    #allocation4 [shape = 's32[2]{0}', space=sflag, size = 0x8, scoped, tag = 'scoped memory for tpu_custom_call.1']
    #allocation5 [shape = 's32[2]{0}', space=sflag, size = 0x8, scoped, tag = 'scoped memory for tpu_custom_call.1']
    #allocation6 [shape = 'u8[262144]{0}', space=vmem, size = 0x40000, scoped, tag = 'input window, operand 1']
    #allocation7 [shape = 's32[2]{0}', space=sflag, size = 0x8, scoped, tag = 'scoped memory for tpu_custom_call.1']
    #allocation8 [shape = 'u8[32768]{0}', space=vmem, size = 0x8000, scoped, tag = 'input window, operand 3, single buffered']
    #allocation9 [shape = 'u8[4096]{0}', space=vmem, size = 0x1000, scoped, tag = 'output window, operand 0, single buffered']
    %10 = vsyncpa [#allocation4], 0
    %s11 = scalar_lea.sflag [#allocation4], 1
    %12 = vsyncpa %s11, 0
    %13 = vsyncpa [#allocation7], 0
    %s14 = scalar_lea.sflag [#allocation7], 1
    %15 = vsyncpa %s14, 0
    %16 = vsyncpa [#allocation5], 0
    loop: start=0, step=1, limit=4
    $region2: #{tpu_custom_call.1} parent=1 // loop_pre_header
      _
    $region3: #{tpu_custom_call.1} parent=1 // loop_header
      %s18 = sphi 0, %s22
      %p19 = scmp.ge.s32.totalorder %s18, 4
      %s25 = sphi 0, %s37
      %s26 = sphi 0, %s33
      %s27 = sphi 0, %s25
      %s28 = sphi 0, %s26
      %s29 = sphi 0, %s27
      %s30 = sphi 0, %s28
      %s42 = sphi 0, %s44
      %s45 = sphi 0, %s42
      %s46 = sphi 0, %s45
      %s62 = sphi 0, %s46
      %s68 = sphi 0, %s70
      %s71 = sphi 0, %s68
      %s72 = sphi 0, %s71
      %s88 = sphi 0, %s72
      %s92 = sphi 0, %s92
      %s94 = sphi 0, %s92
      %s95 = sphi 0, %s94
      %s109 = sphi 0, %s95
      %s113 = sphi 0, %s113
      %s115 = sphi 0, %s113
      %s116 = sphi 0, %s115
      %s130 = sphi 0, %s116
      %s134 = sphi 0, %s134
      %s136 = sphi 0, %s134
      %s137 = sphi 0, %s136
      %s151 = sphi 0, %s137
      %s157 = sphi 0, %s159
      %s160 = sphi 0, %s157
      %s161 = sphi 0, %s160
      %s177 = sphi 0, %s161
    $region4: #{tpu_custom_call.1} parent=1 // loop_header_branch
      %21 = sbr.rel (%p19) target = $region8
    $region5: #{tpu_custom_call.1} parent=1 // loop_body
      %s23 = ssub.s32 %s18, 1
      %s24 = ssub.s32 %s18, 2
      %s31 = sadd.s32 1, %s26
      %p32 = scmp.ge.s32.totalorder %s31, 2
      %s33 = scalar_select %p32, 0, %s31
      %s34 = sadd.s32 1, %s25
      %s35 = scalar_select %p32, %s34, %s25
      %p36 = scmp.ge.s32.totalorder %s35, 1
      %s37 = scalar_select %p36, 0, %s35
      %s38 = ssub.s32 %s25, %s37
      %s39 = ssub.s32 %s26, %s33
      %s40 = sor.u32 %s38, %s39
      %p41 = scmp.eq.s32.totalorder %s40, 0
      %s43 = sadd.s32 %s42, 1
      %s44 = scalar_select %p41, %s42, %s43
      %p47 = pneg %p41
      %p48 = scmp.eq.s32.totalorder %s18, 1
      %p49 = por %p47, %p48
      %p50 = scmp.ne.s32.totalorder %s42, %s45
      %p51 = scmp.eq.s32.totalorder %s18, 0
      %p52 = por %p50, %p51
      %p53 = scmp.ne.s32.totalorder %s42, %s45
      %p54 = scmp.eq.s32.totalorder %s23, 1
      %p55 = por %p53, %p54
      %p56 = scmp.ne.s32.totalorder %s45, %s46
      %p57 = scmp.eq.s32.totalorder %s23, 0
      %p58 = por %p56, %p57
      %p59 = scmp.ne.s32.totalorder %s45, %s46
      %p60 = scmp.eq.s32.totalorder %s24, 1
      %p61 = por %p59, %p60
      %p63 = scmp.ne.s32.totalorder %s46, %s62
      %p64 = scmp.eq.s32.totalorder %s24, 0
      %p65 = por %p63, %p64
      %s66 = ssub.s32 %s26, %s33
      %p67 = scmp.eq.s32.totalorder %s66, 0
      %s69 = sadd.s32 %s68, 1
      %s70 = scalar_select %p67, %s68, %s69
      %p73 = pneg %p67
      %p74 = scmp.eq.s32.totalorder %s18, 1
      %p75 = por %p73, %p74
      %p76 = scmp.ne.s32.totalorder %s68, %s71
      %p77 = scmp.eq.s32.totalorder %s18, 0
      %p78 = por %p76, %p77
      %p79 = scmp.ne.s32.totalorder %s68, %s71
      %p80 = scmp.eq.s32.totalorder %s23, 1
      %p81 = por %p79, %p80
      %p82 = scmp.ne.s32.totalorder %s71, %s72
      %p83 = scmp.eq.s32.totalorder %s23, 0
      %p84 = por %p82, %p83
      %p85 = scmp.ne.s32.totalorder %s71, %s72
      %p86 = scmp.eq.s32.totalorder %s24, 1
      %p87 = por %p85, %p86
      %p89 = scmp.ne.s32.totalorder %s72, %s88
      %p90 = scmp.eq.s32.totalorder %s24, 0
      %p91 = por %p89, %p90
      %s93 = sadd.s32 %s92, 1
      %p96 = scmp.eq.s32.totalorder %s18, 1
      %p97 = scmp.ne.s32.totalorder %s92, %s94
      %p98 = scmp.eq.s32.totalorder %s18, 0
      %p99 = por %p97, %p98
      %p100 = scmp.ne.s32.totalorder %s92, %s94
      %p101 = scmp.eq.s32.totalorder %s23, 1
      %p102 = por %p100, %p101
      %p103 = scmp.ne.s32.totalorder %s94, %s95
      %p104 = scmp.eq.s32.totalorder %s23, 0
      %p105 = por %p103, %p104
      %p106 = scmp.ne.s32.totalorder %s94, %s95
      %p107 = scmp.eq.s32.totalorder %s24, 1
      %p108 = por %p106, %p107
      %p110 = scmp.ne.s32.totalorder %s95, %s109
      %p111 = scmp.eq.s32.totalorder %s24, 0
      %p112 = por %p110, %p111
      %s114 = sadd.s32 %s113, 1
      %p117 = scmp.eq.s32.totalorder %s18, 1
      %p118 = scmp.ne.s32.totalorder %s113, %s115
      %p119 = scmp.eq.s32.totalorder %s18, 0
      %p120 = por %p118, %p119
      %p121 = scmp.ne.s32.totalorder %s113, %s115
      %p122 = scmp.eq.s32.totalorder %s23, 1
      %p123 = por %p121, %p122
      %p124 = scmp.ne.s32.totalorder %s115, %s116
      %p125 = scmp.eq.s32.totalorder %s23, 0
      %p126 = por %p124, %p125
      %p127 = scmp.ne.s32.totalorder %s115, %s116
      %p128 = scmp.eq.s32.totalorder %s24, 1
      %p129 = por %p127, %p128
      %p131 = scmp.ne.s32.totalorder %s116, %s130
      %p132 = scmp.eq.s32.totalorder %s24, 0
      %p133 = por %p131, %p132
      %s135 = sadd.s32 %s134, 1
      %p138 = scmp.eq.s32.totalorder %s18, 1
      %p139 = scmp.ne.s32.totalorder %s134, %s136
      %p140 = scmp.eq.s32.totalorder %s18, 0
      %p141 = por %p139, %p140
      %p142 = scmp.ne.s32.totalorder %s134, %s136
      %p143 = scmp.eq.s32.totalorder %s23, 1
      %p144 = por %p142, %p143
      %p145 = scmp.ne.s32.totalorder %s136, %s137
      %p146 = scmp.eq.s32.totalorder %s23, 0
      %p147 = por %p145, %p146
      %p148 = scmp.ne.s32.totalorder %s136, %s137
      %p149 = scmp.eq.s32.totalorder %s24, 1
      %p150 = por %p148, %p149
      %p152 = scmp.ne.s32.totalorder %s137, %s151
      %p153 = scmp.eq.s32.totalorder %s24, 0
      %p154 = por %p152, %p153
      %s155 = ssub.s32 %s25, %s37
      %p156 = scmp.eq.s32.totalorder %s155, 0
      %s158 = sadd.s32 %s157, 1
      %s159 = scalar_select %p156, %s157, %s158
      %p162 = pneg %p156
      %p163 = scmp.eq.s32.totalorder %s18, 1
      %p164 = por %p162, %p163
      %p165 = scmp.ne.s32.totalorder %s157, %s160
      %p166 = scmp.eq.s32.totalorder %s18, 0
      %p167 = por %p165, %p166
      %p168 = scmp.ne.s32.totalorder %s157, %s160
      %p169 = scmp.eq.s32.totalorder %s23, 1
      %p170 = por %p168, %p169
      %p171 = scmp.ne.s32.totalorder %s160, %s161
      %p172 = scmp.eq.s32.totalorder %s23, 0
      %p173 = por %p171, %p172
      %p174 = scmp.ne.s32.totalorder %s160, %s161
      %p175 = scmp.eq.s32.totalorder %s24, 1
      %p176 = por %p174, %p175
      %p178 = scmp.ne.s32.totalorder %s161, %s177
      %p179 = scmp.eq.s32.totalorder %s24, 0
      %p180 = por %p178, %p179
      %p181 = scmp.le.s32.totalorder 1, %s18
      %p182 = scmp.lt.s32.totalorder %s18, 3
      %p183 = pnand %p181, %p182
      %p184 = pneg %p183
      // Predicated region
      $region9: #{tpu_custom_call.1} parent=5 // pred_check
        _
      $region10: #{tpu_custom_call.1} parent=5 // pred_check_branch
        %186 = sbr.rel (%p183) target = $region12
      $region11: #{tpu_custom_call.1} parent=5 // pred_region
        %s187 = ssub.s32 %s18, 1
        // Predicated region
        $region13: #{tpu_custom_call.1} parent=11 // pred_check
          %p188 = pneg %p105
        $region14: #{tpu_custom_call.1} parent=11 // pred_check_branch
          %190 = sbr.rel (%p188) target = $region16
        $region15: #{tpu_custom_call.1} parent=11 // pred_region
          _
        $region16: #{tpu_custom_call.1} parent=11 // pred_fallthru
          _
        // Predicated region
        $region17: #{tpu_custom_call.1} parent=11 // pred_check
          %p191 = pneg %p126
        $region18: #{tpu_custom_call.1} parent=11 // pred_check_branch
          %193 = sbr.rel (%p191) target = $region20
        $region19: #{tpu_custom_call.1} parent=11 // pred_region
          %195 = vsyncadd [#allocation7], 0
          %s196 = sshll.u32 %s3, 4
          %s197 = int_to_ptr.hbm [resolvable:$true] %s196
          %s198 = sshll.u32 [#allocation8], 4
          %s199 = int_to_ptr.vmem [resolvable:$true] %s198
          %204 = dma.hbm_to_vmem [thread:$0]  %s197, 1024, %s199, [#allocation7], 64, 64, 4
        $region20: #{tpu_custom_call.1} parent=11 // pred_fallthru
          _
        // Predicated region
        $region21: #{tpu_custom_call.1} parent=11 // pred_check
          %p205 = pneg %p147
        $region22: #{tpu_custom_call.1} parent=11 // pred_check_branch
          %207 = sbr.rel (%p205) target = $region24
        $region23: #{tpu_custom_call.1} parent=11 // pred_region
          _
        $region24: #{tpu_custom_call.1} parent=11 // pred_fallthru
          _
      $region12: #{tpu_custom_call.1} parent=5 // pred_fallthru
        _
      %p208 = scmp.lt.s32.totalorder %s18, 2
      // Predicated region
      $region25: #{tpu_custom_call.1} parent=5 // pred_check
        %p209 = pneg %p208
      $region26: #{tpu_custom_call.1} parent=5 // pred_check_branch
        %211 = sbr.rel (%p209) target = $region28
      $region27: #{tpu_custom_call.1} parent=5 // pred_region
        // Predicated region
        $region29: #{tpu_custom_call.1} parent=27 // pred_check
          %p212 = pneg %p52
        $region30: #{tpu_custom_call.1} parent=27 // pred_check_branch
          %214 = sbr.rel (%p212) target = $region32
        $region31: #{tpu_custom_call.1} parent=27 // pred_region
          %s215 = sand.u32 %s42, 1
          %s216 = scalar_lea.sflag [#allocation4], %s215
          %s217 = sand.u32 %s42, 1
          %s218 = smul.addr %s217, 16
          %s219 = scalar_lea.vmem [#allocation3], %s218
          %s220 = smul.u32 4, %s26
          %222 = vsyncadd %s216, 0
          %s223 = smul.addr %s25, 8
          %s224 = sadd.s32 %s220, %s223
          %s225 = smul.addr %s224, 4
          %s226 = scalar_lea.hbm %s0, %s225
          %s228 = sshll.u32 %s226, 4
          %s229 = int_to_ptr.hbm [resolvable:$true] %s228
          %s230 = sshll.u32 %s219, 4
          %s231 = int_to_ptr.vmem [resolvable:$true] %s230
          %233 = dma.hbm_to_vmem [thread:$0]  %s229, 256, %s231, %s216
        $region32: #{tpu_custom_call.1} parent=27 // pred_fallthru
          _
        // Predicated region
        $region33: #{tpu_custom_call.1} parent=27 // pred_check
          %p234 = pneg %p78
        $region34: #{tpu_custom_call.1} parent=27 // pred_check_branch
          %236 = sbr.rel (%p234) target = $region36
        $region35: #{tpu_custom_call.1} parent=27 // pred_region
          %s237 = sand.u32 %s18, 1
          %s238 = scalar_lea.sflag [#allocation7], %s237
          %s239 = sand.u32 %s68, 1
          %s240 = smul.addr %s239, 256
          %s241 = scalar_lea.vmem [#allocation6], %s240
          %s242 = smul.u32 64, %s26
          %244 = vsyncadd %s238, 0
          %s245 = smul.addr %s242, 4
          %s246 = scalar_lea.hbm %s1, %s245
          %s247 = sshll.u32 %s246, 4
          %s248 = int_to_ptr.hbm [resolvable:$true] %s247
          %s249 = sshll.u32 %s241, 4
          %s250 = int_to_ptr.vmem [resolvable:$true] %s249
          %255 = dma.hbm_to_vmem [thread:$0]  %s248, 4096, %s250, %s238, 64, 64, 4
        $region36: #{tpu_custom_call.1} parent=27 // pred_fallthru
          _
      $region28: #{tpu_custom_call.1} parent=5 // pred_fallthru
        _
      %p256 = scmp.le.s32.totalorder 1, %s18
      %p257 = scmp.lt.s32.totalorder %s18, 3
      %p258 = pnand %p256, %p257
      %p259 = pneg %p258
      // Predicated region
      $region37: #{tpu_custom_call.1} parent=5 // pred_check
        _
      $region38: #{tpu_custom_call.1} parent=5 // pred_check_branch
        %261 = sbr.rel (%p258) target = $region40
      $region39: #{tpu_custom_call.1} parent=5 // pred_region
        %s262 = ssub.s32 %s18, 1
        %s263 = sand.u32 %s45, 1
        %s264 = scalar_lea.sflag [#allocation4], %s263
        %s265 = sand.u32 %s45, 1
        %s266 = smul.addr %s265, 16
        %s267 = scalar_lea.vmem [#allocation3], %s266
        // Predicated region
        $region41: #{tpu_custom_call.1} parent=39 // pred_check
          %p268 = pneg %p58
        $region42: #{tpu_custom_call.1} parent=39 // pred_check_branch
          %270 = sbr.rel (%p268) target = $region44
        $region43: #{tpu_custom_call.1} parent=39 // pred_region
          %272 = dma.done %s264, 256
        $region44: #{tpu_custom_call.1} parent=39 // pred_fallthru
          _
        %s273 = sand.u32 %s23, 1
        %s274 = scalar_lea.sflag [#allocation7], %s273
        %s275 = sand.u32 %s71, 1
        %s276 = smul.addr %s275, 256
        %s277 = scalar_lea.vmem [#allocation6], %s276
        // Predicated region
        $region45: #{tpu_custom_call.1} parent=39 // pred_check
          %p278 = pneg %p84
        $region46: #{tpu_custom_call.1} parent=39 // pred_check_branch
          %280 = sbr.rel (%p278) target = $region48
        $region47: #{tpu_custom_call.1} parent=39 // pred_region
          %282 = dma.done %s274, 4096
        $region48: #{tpu_custom_call.1} parent=39 // pred_fallthru
          _
        // Predicated region
        $region49: #{tpu_custom_call.1} parent=39 // pred_check
          %p283 = pneg %p126
        $region50: #{tpu_custom_call.1} parent=39 // pred_check_branch
          %285 = sbr.rel (%p283) target = $region52
        $region51: #{tpu_custom_call.1} parent=39 // pred_region
          %287 = dma.done [#allocation7], 1024
        $region52: #{tpu_custom_call.1} parent=39 // pred_fallthru
          _
        %s288 = sand.u32 %s45, 1
        %s289 = scalar_lea.sflag [#allocation4], %s288
        %s290 = sand.u32 %s45, 1
        %s291 = smul.addr %s290, 16
        %s292 = scalar_lea.vmem [#allocation3], %s291
        %p293 = pneg %p58
        %p294 = pneg %p55
        %s295 = sand.u32 %s23, 1
        %s296 = scalar_lea.sflag [#allocation7], %s295
        %s297 = sand.u32 %s71, 1
        %s298 = smul.addr %s297, 256
        %s299 = scalar_lea.vmem [#allocation6], %s298
        %p300 = pneg %p84
        %p301 = pneg %p81
        %p302 = pneg %p105
        %p303 = pneg %p102
        %p304 = pneg %p126
        %p305 = pneg %p123
        %p306 = pneg %p147
        %p307 = pneg %p144
        %p308 = pneg %p173
        %p309 = pneg %p170
        %s310 = smul.u32 4, %s28
        %s311 = smul.u32 64, %s28
        %p312 = scmp.eq.s32.totalorder %s28, 0
        // Predicated region
        $region53: #{tpu_custom_call.1} parent=39 // pred_check
          %p313 = pneg %p312
        $region54: #{tpu_custom_call.1} parent=39 // pred_check_branch
          %315 = sbr.rel (%p313) target = $region56
        $region55: #{tpu_custom_call.1} parent=39 // pred_region
          %316 = vst [vmem:[#allocation2] sm:$0xff] 0.0
        $region56: #{tpu_custom_call.1} parent=39 // pred_fallthru
          _
        %v317 = vld [vmem:[#allocation2] sm:$0xff]
        %v318 = vld [vmem:[%s267] sm:$0xff]
        %v319 = vld [vmem:[%s267 + $0x8] sm:$0xff]
        %v320 = vld [vmem:[%s277] sm:$0xf]
        %v321 = vld [vmem:[%s277 + $0x4] sm:$0xf]
        %v322 = vld [vmem:[%s277 + $0x8] sm:$0xf]
        %v323 = vld [vmem:[%s277 + $0xc] sm:$0xf]
        %v324 = vld [vmem:[%s277 + $0x10] sm:$0xf]
        %v325 = vld [vmem:[%s277 + $0x14] sm:$0xf]
        %v326 = vld [vmem:[%s277 + $0x18] sm:$0xf]
        %v327 = vld [vmem:[%s277 + $0x1c] sm:$0xf]
        %v328 = vld [vmem:[%s277 + $0x20] sm:$0xf]
        %v329 = vld [vmem:[%s277 + $0x24] sm:$0xf]
        %v330 = vld [vmem:[%s277 + $0x28] sm:$0xf]
        %v331 = vld [vmem:[%s277 + $0x2c] sm:$0xf]
        %v332 = vld [vmem:[%s277 + $0x30] sm:$0xf]
        %v333 = vld [vmem:[%s277 + $0x34] sm:$0xf]
        %v334 = vld [vmem:[%s277 + $0x38] sm:$0xf]
        %v335 = vld [vmem:[%s277 + $0x3c] sm:$0xf]
        %v336 = vld [vmem:[%s277 + $0x40] sm:$0xf]
        %v337 = vld [vmem:[%s277 + $0x44] sm:$0xf]
        %v338 = vld [vmem:[%s277 + $0x48] sm:$0xf]
        %v339 = vld [vmem:[%s277 + $0x4c] sm:$0xf]
        %v340 = vld [vmem:[%s277 + $0x50] sm:$0xf]
        %v341 = vld [vmem:[%s277 + $0x54] sm:$0xf]
        %v342 = vld [vmem:[%s277 + $0x58] sm:$0xf]
        %v343 = vld [vmem:[%s277 + $0x5c] sm:$0xf]
        %v344 = vld [vmem:[%s277 + $0x60] sm:$0xf]
        %v345 = vld [vmem:[%s277 + $0x64] sm:$0xf]
        %v346 = vld [vmem:[%s277 + $0x68] sm:$0xf]
        %v347 = vld [vmem:[%s277 + $0x6c] sm:$0xf]
        %v348 = vld [vmem:[%s277 + $0x70] sm:$0xf]
        %v349 = vld [vmem:[%s277 + $0x74] sm:$0xf]
        %v350 = vld [vmem:[%s277 + $0x78] sm:$0xf]
        %v351 = vld [vmem:[%s277 + $0x7c] sm:$0xf]
        %v352 = vld [vmem:[%s277 + $0x80] sm:$0xf]
        %v353 = vld [vmem:[%s277 + $0x84] sm:$0xf]
        %v354 = vld [vmem:[%s277 + $0x88] sm:$0xf]
        %v355 = vld [vmem:[%s277 + $0x8c] sm:$0xf]
        %v356 = vld [vmem:[%s277 + $0x90] sm:$0xf]
        %v357 = vld [vmem:[%s277 + $0x94] sm:$0xf]
        %v358 = vld [vmem:[%s277 + $0x98] sm:$0xf]
        %v359 = vld [vmem:[%s277 + $0x9c] sm:$0xf]
        %v360 = vld [vmem:[%s277 + $0xa0] sm:$0xf]
        %v361 = vld [vmem:[%s277 + $0xa4] sm:$0xf]
        %v362 = vld [vmem:[%s277 + $0xa8] sm:$0xf]
        %v363 = vld [vmem:[%s277 + $0xac] sm:$0xf]
        %v364 = vld [vmem:[%s277 + $0xb0] sm:$0xf]
        %v365 = vld [vmem:[%s277 + $0xb4] sm:$0xf]
        %v366 = vld [vmem:[%s277 + $0xb8] sm:$0xf]
        %v367 = vld [vmem:[%s277 + $0xbc] sm:$0xf]
        %v368 = vld [vmem:[%s277 + $0xc0] sm:$0xf]
        %v369 = vld [vmem:[%s277 + $0xc4] sm:$0xf]
        %v370 = vld [vmem:[%s277 + $0xc8] sm:$0xf]
        %v371 = vld [vmem:[%s277 + $0xcc] sm:$0xf]
        %v372 = vld [vmem:[%s277 + $0xd0] sm:$0xf]
        %v373 = vld [vmem:[%s277 + $0xd4] sm:$0xf]
        %v374 = vld [vmem:[%s277 + $0xd8] sm:$0xf]
        %v375 = vld [vmem:[%s277 + $0xdc] sm:$0xf]
        %v376 = vld [vmem:[%s277 + $0xe0] sm:$0xf]
        %v377 = vld [vmem:[%s277 + $0xe4] sm:$0xf]
        %v378 = vld [vmem:[%s277 + $0xe8] sm:$0xf]
        %v379 = vld [vmem:[%s277 + $0xec] sm:$0xf]
        %v380 = vld [vmem:[%s277 + $0xf0] sm:$0xf]
        %v381 = vld [vmem:[%s277 + $0xf4] sm:$0xf]
        %v382 = vld [vmem:[%s277 + $0xf8] sm:$0xf]
        %v383 = vld [vmem:[%s277 + $0xfc] sm:$0xf]
        %v386 = vunpack.c.l.b16 %v318
        %v387 = vunpack.c.h.b16 %v318
        %v388 = vunpack.c.l.b16 %v319
        %v389 = vunpack.c.h.b16 %v319
        %v390 = vpack.c.b16 %v386, %v386
        %v391 = vpack.c.b16 %v387, %v387
        %v392 = vpack.c.b16 %v388, %v388
        %v393 = vpack.c.b16 %v389, %v389
        %v462 = vunpack.c.l.b16 %v320
        %v463 = vunpack.c.l.b16 %v321
        %v464 = vunpack.c.l.b16 %v322
        %v465 = vunpack.c.l.b16 %v323
        %v466 = vunpack.c.l.b16 %v324
        %v467 = vunpack.c.l.b16 %v325
        %v468 = vunpack.c.l.b16 %v326
        %v469 = vunpack.c.l.b16 %v327
        %v470 = vunpack.c.l.b16 %v328
        %v471 = vunpack.c.l.b16 %v329
        %v472 = vunpack.c.l.b16 %v330
        %v473 = vunpack.c.l.b16 %v331
        %v474 = vunpack.c.l.b16 %v332
        %v475 = vunpack.c.l.b16 %v333
        %v476 = vunpack.c.l.b16 %v334
        %v477 = vunpack.c.l.b16 %v335
        %v478 = vunpack.c.l.b16 %v336
        %v479 = vunpack.c.l.b16 %v337
        %v480 = vunpack.c.l.b16 %v338
        %v481 = vunpack.c.l.b16 %v339
        %v482 = vunpack.c.l.b16 %v340
        %v483 = vunpack.c.l.b16 %v341
        %v484 = vunpack.c.l.b16 %v342
        %v485 = vunpack.c.l.b16 %v343
        %v486 = vunpack.c.l.b16 %v344
        %v487 = vunpack.c.l.b16 %v345
        %v488 = vunpack.c.l.b16 %v346
        %v489 = vunpack.c.l.b16 %v347
        %v490 = vunpack.c.l.b16 %v348
        %v491 = vunpack.c.l.b16 %v349
        %v492 = vunpack.c.l.b16 %v350
        %v493 = vunpack.c.l.b16 %v351
        %v494 = vunpack.c.l.b16 %v352
        %v495 = vunpack.c.l.b16 %v353
        %v496 = vunpack.c.l.b16 %v354
        %v497 = vunpack.c.l.b16 %v355
        %v498 = vunpack.c.l.b16 %v356
        %v499 = vunpack.c.l.b16 %v357
        %v500 = vunpack.c.l.b16 %v358
        %v501 = vunpack.c.l.b16 %v359
        %v502 = vunpack.c.l.b16 %v360
        %v503 = vunpack.c.l.b16 %v361
        %v504 = vunpack.c.l.b16 %v362
        %v505 = vunpack.c.l.b16 %v363
        %v506 = vunpack.c.l.b16 %v364
        %v507 = vunpack.c.l.b16 %v365
        %v508 = vunpack.c.l.b16 %v366
        %v509 = vunpack.c.l.b16 %v367
        %v510 = vunpack.c.l.b16 %v368
        %v511 = vunpack.c.l.b16 %v369
        %v512 = vunpack.c.l.b16 %v370
        %v513 = vunpack.c.l.b16 %v371
        %v514 = vunpack.c.l.b16 %v372
        %v515 = vunpack.c.l.b16 %v373
        %v516 = vunpack.c.l.b16 %v374
        %v517 = vunpack.c.l.b16 %v375
        %v518 = vunpack.c.l.b16 %v376
        %v519 = vunpack.c.l.b16 %v377
        %v520 = vunpack.c.l.b16 %v378
        %v521 = vunpack.c.l.b16 %v379
        %v522 = vunpack.c.l.b16 %v380
        %v523 = vunpack.c.l.b16 %v381
        %v524 = vunpack.c.l.b16 %v382
        %v525 = vunpack.c.l.b16 %v383
        %v526 = vpack.c.b16 %v463, %v462
        %v527 = vpack.c.b16 %v465, %v464
        %v528 = vpack.c.b16 %v467, %v466
        %v529 = vpack.c.b16 %v469, %v468
        %v530 = vpack.c.b16 %v471, %v470
        %v531 = vpack.c.b16 %v473, %v472
        %v532 = vpack.c.b16 %v475, %v474
        %v533 = vpack.c.b16 %v477, %v476
        %v534 = vpack.c.b16 %v479, %v478
        %v535 = vpack.c.b16 %v481, %v480
        %v536 = vpack.c.b16 %v483, %v482
        %v537 = vpack.c.b16 %v485, %v484
        %v538 = vpack.c.b16 %v487, %v486
        %v539 = vpack.c.b16 %v489, %v488
        %v540 = vpack.c.b16 %v491, %v490
        %v541 = vpack.c.b16 %v493, %v492
        %v542 = vpack.c.b16 %v495, %v494
        %v543 = vpack.c.b16 %v497, %v496
        %v544 = vpack.c.b16 %v499, %v498
        %v545 = vpack.c.b16 %v501, %v500
        %v546 = vpack.c.b16 %v503, %v502
        %v547 = vpack.c.b16 %v505, %v504
        %v548 = vpack.c.b16 %v507, %v506
        %v549 = vpack.c.b16 %v509, %v508
        %v550 = vpack.c.b16 %v511, %v510
        %v551 = vpack.c.b16 %v513, %v512
        %v552 = vpack.c.b16 %v515, %v514
        %v553 = vpack.c.b16 %v517, %v516
        %v554 = vpack.c.b16 %v519, %v518
        %v555 = vpack.c.b16 %v521, %v520
        %v556 = vpack.c.b16 %v523, %v522
        %v557 = vpack.c.b16 %v525, %v524
        %590 = vmatpush.bf16.msra.mxu0 %v533
        %591 = vmatpush.bf16.msra.mxu0 %v532
        %592 = vmatpush.bf16.msra.mxu0 %v531
        %593 = vmatpush.bf16.msra.mxu0 %v530
        %594 = vmatpush.bf16.msra.mxu0 %v529
        %595 = vmatpush.bf16.msra.mxu0 %v528
        %596 = vmatpush.bf16.msra.mxu0 %v527
        %597 = vmatpush.bf16.msra.mxu0 %v526
        %598 = vmatmul.bf16.gmra.mxu0 %v390
        %v599 = vpop.f32.mrf.mxu0
        %v600 = vadd.f32 0.0, %v599
        %v601 = vpop.f32.mrf.mxu0
        %602 = vdwg.mxu0
        %603 = vmatpush.bf16.msra.mxu0 %v541
        %604 = vmatpush.bf16.msra.mxu0 %v540
        %605 = vmatpush.bf16.msra.mxu0 %v539
        %606 = vmatpush.bf16.msra.mxu0 %v538
        %607 = vmatpush.bf16.msra.mxu0 %v537
        %608 = vmatpush.bf16.msra.mxu0 %v536
        %609 = vmatpush.bf16.msra.mxu0 %v535
        %610 = vmatpush.bf16.msra.mxu0 %v534
        %611 = vmatmul.bf16.gmra.mxu0 %v391
        %v612 = vpop.f32.mrf.mxu0
        %v613 = vadd.f32 %v600, %v612
        %v614 = vpop.f32.mrf.mxu0
        %615 = vdwg.mxu0
        %616 = vmatpush.bf16.msra.mxu0 %v549
        %617 = vmatpush.bf16.msra.mxu0 %v548
        %618 = vmatpush.bf16.msra.mxu0 %v547
        %619 = vmatpush.bf16.msra.mxu0 %v546
        %620 = vmatpush.bf16.msra.mxu0 %v545
        %621 = vmatpush.bf16.msra.mxu0 %v544
        %622 = vmatpush.bf16.msra.mxu0 %v543
        %623 = vmatpush.bf16.msra.mxu0 %v542
        %624 = vmatmul.bf16.gmra.mxu0 %v392
        %v625 = vpop.f32.mrf.mxu0
        %v626 = vadd.f32 %v613, %v625
        %v627 = vpop.f32.mrf.mxu0
        %628 = vdwg.mxu0
        %629 = vmatpush.bf16.msra.mxu0 %v557
        %630 = vmatpush.bf16.msra.mxu0 %v556
        %631 = vmatpush.bf16.msra.mxu0 %v555
        %632 = vmatpush.bf16.msra.mxu0 %v554
        %633 = vmatpush.bf16.msra.mxu0 %v553
        %634 = vmatpush.bf16.msra.mxu0 %v552
        %635 = vmatpush.bf16.msra.mxu0 %v551
        %636 = vmatpush.bf16.msra.mxu0 %v550
        %637 = vmatmul.bf16.gmra.mxu0 %v393
        %v638 = vpop.f32.mrf.mxu0
        %v639 = vadd.f32 %v626, %v638
        %v640 = vpop.f32.mrf.mxu0
        %641 = vdwg.mxu0
        %v642 = vadd.f32 %v317, %v639
        %643 = vst [vmem:[#allocation2] sm:$0xff] %v642
        %p644 = scmp.eq.s32.totalorder %s28, 1
        // Predicated region
        $region57: #{tpu_custom_call.1} parent=39 // pred_check
          %p645 = pneg %p644
        $region58: #{tpu_custom_call.1} parent=39 // pred_check_branch
          %647 = sbr.rel (%p645) target = $region60
        $region59: #{tpu_custom_call.1} parent=39 // pred_region
          %v648 = vld [vmem:[#allocation2] sm:$0xff]
          %v649 = vld [vmem:[%s2] sm:$0x1]
          %v651 = vperm.slane %v649, 0
          %v653 = vadd.f32 %v648, %v651
          %v654 = vmax.f32 %v653, 0.0
          %v655 = vpack.c.bf16 %v654, %v654
          %v656 = vld [vmem:[#allocation8] sm:$0xf]
          %v657 = vld [vmem:[#allocation8 + $0x4] sm:$0xf]
          %v658 = vld [vmem:[#allocation8 + $0x8] sm:$0xf]
          %v659 = vld [vmem:[#allocation8 + $0xc] sm:$0xf]
          %v660 = vld [vmem:[#allocation8 + $0x10] sm:$0xf]
          %v661 = vld [vmem:[#allocation8 + $0x14] sm:$0xf]
          %v662 = vld [vmem:[#allocation8 + $0x18] sm:$0xf]
          %v663 = vld [vmem:[#allocation8 + $0x1c] sm:$0xf]
          %v664 = vld [vmem:[#allocation8 + $0x20] sm:$0xf]
          %v665 = vld [vmem:[#allocation8 + $0x24] sm:$0xf]
          %v666 = vld [vmem:[#allocation8 + $0x28] sm:$0xf]
          %v667 = vld [vmem:[#allocation8 + $0x2c] sm:$0xf]
          %v668 = vld [vmem:[#allocation8 + $0x30] sm:$0xf]
          %v669 = vld [vmem:[#allocation8 + $0x34] sm:$0xf]
          %v670 = vld [vmem:[#allocation8 + $0x38] sm:$0xf]
          %v671 = vld [vmem:[#allocation8 + $0x3c] sm:$0xf]
          %v672 = vld [vmem:[%s4] sm:$0x1]
          %v674 = vperm.slane %v672, 0
          %v692 = vunpack.c.l.b16 %v656
          %v693 = vunpack.c.l.b16 %v657
          %v694 = vunpack.c.l.b16 %v658
          %v695 = vunpack.c.l.b16 %v659
          %v696 = vunpack.c.l.b16 %v660
          %v697 = vunpack.c.l.b16 %v661
          %v698 = vunpack.c.l.b16 %v662
          %v699 = vunpack.c.l.b16 %v663
          %v700 = vunpack.c.l.b16 %v664
          %v701 = vunpack.c.l.b16 %v665
          %v702 = vunpack.c.l.b16 %v666
          %v703 = vunpack.c.l.b16 %v667
          %v704 = vunpack.c.l.b16 %v668
          %v705 = vunpack.c.l.b16 %v669
          %v706 = vunpack.c.l.b16 %v670
          %v707 = vunpack.c.l.b16 %v671
          %v708 = vpack.c.b16 %v693, %v692
          %v709 = vpack.c.b16 %v695, %v694
          %v710 = vpack.c.b16 %v697, %v696
          %v711 = vpack.c.b16 %v699, %v698
          %v712 = vpack.c.b16 %v701, %v700
          %v713 = vpack.c.b16 %v703, %v702
          %v714 = vpack.c.b16 %v705, %v704
          %v715 = vpack.c.b16 %v707, %v706
          %724 = vmatpush.bf16.msra.mxu0 %v715
          %725 = vmatpush.bf16.msra.mxu0 %v714
          %726 = vmatpush.bf16.msra.mxu0 %v713
          %727 = vmatpush.bf16.msra.mxu0 %v712
          %728 = vmatpush.bf16.msra.mxu0 %v711
          %729 = vmatpush.bf16.msra.mxu0 %v710
          %730 = vmatpush.bf16.msra.mxu0 %v709
          %731 = vmatpush.bf16.msra.mxu0 %v708
          %732 = vmatmul.bf16.gmra.mxu0 %v655
          %v733 = vpop.f32.mrf.mxu0
          %v734 = vadd.f32 %v674, %v733
          %v735 = vpop.f32.mrf.mxu0
          %736 = vdwg.mxu0
          %v737 = vmax.f32 %v734, 0.0
          %738 = vst [vmem:[#allocation9] sm:$0xff] %v737
        $region60: #{tpu_custom_call.1} parent=39 // pred_fallthru
          _
        // Predicated region
        $region61: #{tpu_custom_call.1} parent=39 // pred_check
          %p739 = pneg %p170
        $region62: #{tpu_custom_call.1} parent=39 // pred_check_branch
          %741 = sbr.rel (%p739) target = $region64
        $region63: #{tpu_custom_call.1} parent=39 // pred_region
          %743 = vsyncadd [#allocation5], 0
          %s744 = smul.addr %s27, 8
          %s745 = scalar_lea.hbm %s5, %s744
          %s747 = sshll.u32 [#allocation9], 4
          %s748 = int_to_ptr.vmem [resolvable:$true] %s747
          %s749 = sshll.u32 %s745, 4
          %s750 = int_to_ptr.hbm [resolvable:$true] %s749
          %752 = dma.vmem_to_hbm [thread:$0]  %s748, 128, %s750, [#allocation5]
        $region64: #{tpu_custom_call.1} parent=39 // pred_fallthru
          _
        // Predicated region
        $region65: #{tpu_custom_call.1} parent=39 // pred_check
          %p753 = pneg %p170
        $region66: #{tpu_custom_call.1} parent=39 // pred_check_branch
          %755 = sbr.rel (%p753) target = $region68
        $region67: #{tpu_custom_call.1} parent=39 // pred_region
          %757 = dma.done [#allocation5], 128
        $region68: #{tpu_custom_call.1} parent=39 // pred_fallthru
          _
      $region40: #{tpu_custom_call.1} parent=5 // pred_fallthru
        _
      %p758 = scmp.le.s32.totalorder 2, %s18
      // Predicated region
      $region69: #{tpu_custom_call.1} parent=5 // pred_check
        %p759 = pneg %p758
      $region70: #{tpu_custom_call.1} parent=5 // pred_check_branch
        %761 = sbr.rel (%p759) target = $region72
      $region71: #{tpu_custom_call.1} parent=5 // pred_region
        %s762 = ssub.s32 %s18, 2
      $region72: #{tpu_custom_call.1} parent=5 // pred_fallthru
        _
    $region6: #{tpu_custom_call.1} parent=1 // loop_footer
      %s22 = sadd.s32 1, %s18
    $region7: #{tpu_custom_call.1} parent=1 // loop_footer_branch
      %17 = sbr.rel target = $region3
    $region8: #{tpu_custom_call.1} parent=1 // loop_exit
      _
    %763 = vsyncpa [#allocation4], 1
    %s764 = scalar_lea.sflag [#allocation4], 1
    %765 = vsyncpa %s764, 1
    %766 = vsyncpa [#allocation7], 1
    %s767 = scalar_lea.sflag [#allocation7], 1
    %768 = vsyncpa %s767, 1
    %769 = vsyncpa [#allocation5], 1
    %s770 = scalar_lea.sflag [#allocation5], 1
    %771 = vsyncpa %s770, 1

</llo_original>
